<compile_context>
chip_gen: v7x
topology: tpu7x:2x2x1
jax: 0.10.0
libtpu: 0.0.40
codegen_flags: <defaults>
</compile_context>

<pallas_src>
import jax
import jax.numpy as jnp
from jax.experimental import pallas as pl
from jax.experimental.pallas import tpu as pltpu


def mlp_kernel(x_ref, w1_ref, b1_ref, w2_ref, b2_ref, w3_ref, b3_ref, o_ref):
    x = x_ref[...]                        # (4, TB)   batch on lanes
    w1 = w1_ref[...]                      # (64, 4)   (out, in)

    # ---- fc1: K=4 is far too small for the MXU -> 4 broadcast FMAs on the VPU ----
    h1 = w1[:, 0:1] * x[0:1, :]           # (64,1)*(1,TB) -> (64,TB)
    for k in range(1, 4):                 # static, unrolled at trace time
        h1 = h1 + w1[:, k:k + 1] * x[k:k + 1, :]
    h1 = jnp.maximum(h1 + b1_ref[...], 0.0)                      # ReLU, (64, TB)

    # dropout(p=0.2): identity at inference time.
    # TODO(synk): training-mode dropout (pltpu.prng_seed + prng_random_bits mask) not emitted.

    # ---- fc2: real matmul, keep it on the MXU ----
    h2 = jnp.dot(w2_ref[...], h1, preferred_element_type=jnp.float32) + b2_ref[...]
    h2 = jnp.maximum(h2, 0.0)                                    # (32, TB)

    # ---- fc3: N=1 degenerate -> VPU multiply + sublane reduce instead of a 1-row matmul ----
    out = jnp.sum(w3_ref[...] * h2, axis=0, keepdims=True) + b3_ref[...]   # (1, TB)
    o_ref[...] = out.astype(o_ref.dtype)


def regression_nn_forward(x, params, tile_b=512):
    """x: (B, 4) float32 (PyTorch layout). Returns (B, 1) float32."""
    w1, b1, w2, b2, w3, b3 = params
    B = x.shape[0]
    bp = tile_b * pl.cdiv(B, tile_b)      # pad batch up to a tile multiple

    x_t = x.T                             # (4, B): batch onto lanes
    if bp != B:
        x_t = jnp.pad(x_t, ((0, 0), (0, bp - B)))

    resident = lambda a: pl.BlockSpec(a.shape, lambda i: (0, 0))  # weights stay in VMEM

    out = pl.pallas_call(
        mlp_kernel,
        out_shape=jax.ShapeDtypeStruct((1, bp), jnp.float32),
        grid=(bp // tile_b,),
        in_specs=[
            pl.BlockSpec((4, tile_b), lambda i: (0, i)),          # x tile (lane-dense)
            resident(w1), resident(b1),
            resident(w2), resident(b2),
            resident(w3), resident(b3),
        ],
        out_specs=pl.BlockSpec((1, tile_b), lambda i: (0, i)),    # lane-dense output tile
        compiler_params=pltpu.CompilerParams(
            dimension_semantics=("parallel",),                    # megacore / 2-TC sharding
        ),
    )(x_t, w1, b1, w2, b2, w3, b3)

    return out[:, :B].T                   # back to (B, 1) torch layout


def init_params(key):
    """Parameters in kernel layout (matching torch shapes up to transposition):
       w1 (64,4), b1 (64,1), w2 (32,64), b2 (32,1), w3 (32,1), b3 (1,1)."""
    ks = jax.random.split(key, 6)

    def u(k, shape, fan_in):
        bound = 1.0 / (fan_in ** 0.5)
        return jax.random.uniform(k, shape, jnp.float32, -bound, bound)

    w1, b1 = u(ks[0], (64, 4), 4), u(ks[1], (64, 1), 4)
    w2, b2 = u(ks[2], (32, 64), 64), u(ks[3], (32, 1), 64)
    w3, b3 = u(ks[4], (32, 1), 32), u(ks[5], (1, 1), 32)
    return (w1, b1, w2, b2, w3, b3)


if __name__ == "__main__":
    key = jax.random.PRNGKey(0)
    k_x, k_p = jax.random.split(key)

    B = 8                                  # toy size: launch overhead dominates here
    x = jax.random.normal(k_x, (B, 4), dtype=jnp.float32)
    params = init_params(k_p)

    out = regression_nn_forward(x, params)
    out = jax.block_until_ready(out)

    # pure-JAX reference of the same math (weights are (out, in))
    w1, b1, w2, b2, w3, b3 = params
    ref = jnp.maximum(x @ w1.T + b1.T, 0.0)
    ref = jnp.maximum(ref @ w2.T + b2.T, 0.0)
    ref = ref @ w3 + b3

    assert out.shape == (B, 1)
    assert jnp.allclose(out, ref, atol=1e-5, rtol=1e-5)

    print("KERNEL_OK")
</pallas_src>

<mosaic_0001>
module attributes {stable_mosaic.version = 11 : i64} {
  func.func @mlp_kernel(%arg0: i32, %arg1: memref<4x512xf32, #tpu.memory_space<vmem>>, %arg2: memref<64x4xf32, #tpu.memory_space<vmem>>, %arg3: memref<64x1xf32, #tpu.memory_space<vmem>>, %arg4: memref<32x64xf32, #tpu.memory_space<vmem>>, %arg5: memref<32x1xf32, #tpu.memory_space<vmem>>, %arg6: memref<32x1xf32, #tpu.memory_space<vmem>>, %arg7: memref<1x1xf32, #tpu.memory_space<vmem>>, %arg8: memref<1x512xf32, #tpu.memory_space<vmem>>) attributes {dimension_semantics = [#tpu.dimension_semantics<parallel>], iteration_bounds = array<i64: 1>, scalar_prefetch = 0 : i64, scratch_operands = 0 : i64, tpu.core_type = #tpu.core_type<tc>, window_params = [{transform_indices = @transform_0, window_bounds = array<i64: 4, 512>}, {pipeline_mode = #tpu.pipeline_mode<synchronous>, transform_indices = @transform_1, window_bounds = array<i64: 64, 4>}, {pipeline_mode = #tpu.pipeline_mode<synchronous>, transform_indices = @transform_2, window_bounds = array<i64: 64, 1>}, {pipeline_mode = #tpu.pipeline_mode<synchronous>, transform_indices = @transform_3, window_bounds = array<i64: 32, 64>}, {pipeline_mode = #tpu.pipeline_mode<synchronous>, transform_indices = @transform_4, window_bounds = array<i64: 32, 1>}, {pipeline_mode = #tpu.pipeline_mode<synchronous>, transform_indices = @transform_5, window_bounds = array<i64: 32, 1>}, {pipeline_mode = #tpu.pipeline_mode<synchronous>, transform_indices = @transform_6, window_bounds = array<i64: 1, 1>}, {transform_indices = @transform_7, window_bounds = array<i64: 1, 512>}]} {
    %c0 = arith.constant 0 : index
    %c0_0 = arith.constant 0 : index
    %0 = vector.load %arg1[%c0, %c0_0] : memref<4x512xf32, #tpu.memory_space<vmem>>, vector<4x512xf32>
    %c0_1 = arith.constant 0 : index
    %c0_2 = arith.constant 0 : index
    %1 = vector.load %arg2[%c0_1, %c0_2] : memref<64x4xf32, #tpu.memory_space<vmem>>, vector<64x4xf32>
    %2 = vector.extract_strided_slice %1 {offsets = [0, 0], sizes = [64, 1], strides = [1, 1]} : vector<64x4xf32> to vector<64x1xf32>
    %3 = vector.extract_strided_slice %0 {offsets = [0, 0], sizes = [1, 512], strides = [1, 1]} : vector<4x512xf32> to vector<1x512xf32>
    %4 = vector.broadcast %2 : vector<64x1xf32> to vector<64x512xf32>
    %5 = vector.broadcast %3 : vector<1x512xf32> to vector<64x512xf32>
    %6 = arith.mulf %4, %5 : vector<64x512xf32>
    %7 = vector.extract_strided_slice %1 {offsets = [0, 1], sizes = [64, 1], strides = [1, 1]} : vector<64x4xf32> to vector<64x1xf32>
    %8 = vector.extract_strided_slice %0 {offsets = [1, 0], sizes = [1, 512], strides = [1, 1]} : vector<4x512xf32> to vector<1x512xf32>
    %9 = vector.broadcast %7 : vector<64x1xf32> to vector<64x512xf32>
    %10 = vector.broadcast %8 : vector<1x512xf32> to vector<64x512xf32>
    %11 = arith.mulf %9, %10 : vector<64x512xf32>
    %12 = arith.addf %6, %11 : vector<64x512xf32>
    %13 = vector.extract_strided_slice %1 {offsets = [0, 2], sizes = [64, 1], strides = [1, 1]} : vector<64x4xf32> to vector<64x1xf32>
    %14 = vector.extract_strided_slice %0 {offsets = [2, 0], sizes = [1, 512], strides = [1, 1]} : vector<4x512xf32> to vector<1x512xf32>
    %15 = vector.broadcast %13 : vector<64x1xf32> to vector<64x512xf32>
    %16 = vector.broadcast %14 : vector<1x512xf32> to vector<64x512xf32>
    %17 = arith.mulf %15, %16 : vector<64x512xf32>
    %18 = arith.addf %12, %17 : vector<64x512xf32>
    %19 = vector.extract_strided_slice %1 {offsets = [0, 3], sizes = [64, 1], strides = [1, 1]} : vector<64x4xf32> to vector<64x1xf32>
    %20 = vector.extract_strided_slice %0 {offsets = [3, 0], sizes = [1, 512], strides = [1, 1]} : vector<4x512xf32> to vector<1x512xf32>
    %21 = vector.broadcast %19 : vector<64x1xf32> to vector<64x512xf32>
    %22 = vector.broadcast %20 : vector<1x512xf32> to vector<64x512xf32>
    %23 = arith.mulf %21, %22 : vector<64x512xf32>
    %24 = arith.addf %18, %23 : vector<64x512xf32>
    %c0_3 = arith.constant 0 : index
    %c0_4 = arith.constant 0 : index
    %25 = vector.load %arg3[%c0_3, %c0_4] : memref<64x1xf32, #tpu.memory_space<vmem>>, vector<64x1xf32>
    %26 = vector.broadcast %25 : vector<64x1xf32> to vector<64x512xf32>
    %27 = arith.addf %24, %26 : vector<64x512xf32>
    %cst = arith.constant 0.000000e+00 : f32
    %28 = vector.broadcast %cst : f32 to vector<64x512xf32>
    %29 = arith.maximumf %27, %28 : vector<64x512xf32>
    %c0_5 = arith.constant 0 : index
    %c0_6 = arith.constant 0 : index
    %30 = vector.load %arg4[%c0_5, %c0_6] : memref<32x64xf32, #tpu.memory_space<vmem>>, vector<32x64xf32>
    %cst_7 = arith.constant dense<0.000000e+00> : vector<32x512xf32>
    %31 = tpu.matmul %30, %29, %cst_7 {dimension_numbers = #tpu.dot_dimension_numbers<[1], [0], [0], [1], [0, 0, 1, 1], [], []>} : vector<32x64xf32>, vector<64x512xf32>, vector<32x512xf32> -> vector<32x512xf32>
    %c0_8 = arith.constant 0 : index
    %c0_9 = arith.constant 0 : index
    %32 = vector.load %arg5[%c0_8, %c0_9] : memref<32x1xf32, #tpu.memory_space<vmem>>, vector<32x1xf32>
    %33 = vector.broadcast %32 : vector<32x1xf32> to vector<32x512xf32>
    %34 = arith.addf %31, %33 : vector<32x512xf32>
    %cst_10 = arith.constant 0.000000e+00 : f32
    %35 = vector.broadcast %cst_10 : f32 to vector<32x512xf32>
    %36 = arith.maximumf %34, %35 : vector<32x512xf32>
    %c0_11 = arith.constant 0 : index
    %c0_12 = arith.constant 0 : index
    %37 = vector.load %arg6[%c0_11, %c0_12] : memref<32x1xf32, #tpu.memory_space<vmem>>, vector<32x1xf32>
    %38 = vector.broadcast %37 : vector<32x1xf32> to vector<32x512xf32>
    %39 = arith.mulf %38, %36 : vector<32x512xf32>
    %cst_13 = arith.constant dense<0.000000e+00> : vector<512xf32>
    %40 = vector.multi_reduction <add>, %39, %cst_13 [0] : vector<32x512xf32> to vector<512xf32>
    %41 = vector.shape_cast %40 : vector<512xf32> to vector<1x512xf32>
    %c0_14 = arith.constant 0 : index
    %c0_15 = arith.constant 0 : index
    %42 = vector.load %arg7[%c0_14, %c0_15] : memref<1x1xf32, #tpu.memory_space<vmem>>, vector<1x1xf32>
    %43 = vector.broadcast %42 : vector<1x1xf32> to vector<1x512xf32>
    %44 = arith.addf %41, %43 : vector<1x512xf32>
    %c0_16 = arith.constant 0 : index
    %c0_17 = arith.constant 0 : index
    %45 = vector.load %arg8[%c0_16, %c0_17] : memref<1x512xf32, #tpu.memory_space<vmem>>, vector<1x512xf32>
    tpu.vector_store %arg8[%c0_16, %c0_17], %44 {strides = array<i32>} : memref<1x512xf32, #tpu.memory_space<vmem>>, vector<1x512xf32>,
    return
  }
  func.func @transform_0(%arg0: i32) -> (i32, i32) {
    %c0_i32 = arith.constant 0 : i32
    %c0_i32_0 = arith.constant 0 : i32
    return %c0_i32, %arg0 : i32, i32
  }
  func.func @transform_1(%arg0: i32) -> (i32, i32) {
    %c0_i32 = arith.constant 0 : i32
    %c0_i32_0 = arith.constant 0 : i32
    %c0_i32_1 = arith.constant 0 : i32
    return %c0_i32, %c0_i32_0 : i32, i32
  }
  func.func @transform_2(%arg0: i32) -> (i32, i32) {
    %c0_i32 = arith.constant 0 : i32
    %c0_i32_0 = arith.constant 0 : i32
    %c0_i32_1 = arith.constant 0 : i32
    return %c0_i32, %c0_i32_0 : i32, i32
  }
  func.func @transform_3(%arg0: i32) -> (i32, i32) {
    %c0_i32 = arith.constant 0 : i32
    %c0_i32_0 = arith.constant 0 : i32
    %c0_i32_1 = arith.constant 0 : i32
    return %c0_i32, %c0_i32_0 : i32, i32
  }
  func.func @transform_4(%arg0: i32) -> (i32, i32) {
    %c0_i32 = arith.constant 0 : i32
    %c0_i32_0 = arith.constant 0 : i32
    %c0_i32_1 = arith.constant 0 : i32
    return %c0_i32, %c0_i32_0 : i32, i32
  }
  func.func @transform_5(%arg0: i32) -> (i32, i32) {
    %c0_i32 = arith.constant 0 : i32
    %c0_i32_0 = arith.constant 0 : i32
    %c0_i32_1 = arith.constant 0 : i32
    return %c0_i32, %c0_i32_0 : i32, i32
  }
  func.func @transform_6(%arg0: i32) -> (i32, i32) {
    %c0_i32 = arith.constant 0 : i32
    %c0_i32_0 = arith.constant 0 : i32
    %c0_i32_1 = arith.constant 0 : i32
    return %c0_i32, %c0_i32_0 : i32, i32
  }
  func.func @transform_7(%arg0: i32) -> (i32, i32) {
    %c0_i32 = arith.constant 0 : i32
    %c0_i32_0 = arith.constant 0 : i32
    return %c0_i32, %arg0 : i32, i32
  }
}

</mosaic_0001>

<llo_original>
// kernel: tpu_custom_call.1
$region0: #{tpu_custom_call.1}
  #allocation0 [shape = 'u32[]', space=smem, size = 0x4, offset = 0x4, fixed_abs, tag = 'smem constant byte address 0x4 - core index']
  #allocation1 [shape = 'u32[144,128]{1,0:T(1,128)}', space=vmem, size = 0x12000, scoped, tag = 'internal scratch']
  #allocation2 [shape = 'f32[1,1]{1,0:T(1,128)S(1)}', space=vmem, size = 0x200, scoped, tag = 'scoped memory for tpu_custom_call.1']
  %s0 = inlined_call_operand.vmem [shape: f32[4,512], index: 0, kind: input, shape index: {}]
  %s1 = inlined_call_operand.vmem [shape: f32[64,4], index: 1, kind: input, shape index: {}]
  %s2 = inlined_call_operand.vmem [shape: f32[64,1], index: 2, kind: input, shape index: {}]
  %s3 = inlined_call_operand.vmem [shape: f32[32,64], index: 3, kind: input, shape index: {}]
  %s4 = inlined_call_operand.vmem [shape: f32[32,1], index: 4, kind: input, shape index: {}]
  %s5 = inlined_call_operand.vmem [shape: f32[32,1], index: 5, kind: input, shape index: {}]
  %s6 = inlined_call_operand.<no memory space> [shape: f32[1,1], index: 6, kind: input, shape index: {}]
  %s7 = inlined_call_operand.hbm [shape: f32[1,512], index: 7, kind: output, shape index: {}]
  %s8 = sld [smem:[#allocation0]]
  $region38: #{tpu_custom_call.1} parent=0
    _
  %s10 = ssub.s32 1, %s8
  %s11 = scalar_select 0, %s10, %s8
  %v12 = vstv %s6
  %13 = vst [vmem:[#allocation2] sm:$0x1] %v12
  $region1: #{tpu_custom_call.1} parent=0
    #allocation3 [shape = 'u8[2048]{0}', space=vmem, size = 0x800, scoped, tag = 'output window, operand 0, single buffered']
    #allocation4 [shape = 's32[1]{0}', space=sflag, size = 0x4, scoped, tag = 'scoped memory for tpu_custom_call.1']
    %14 = vsyncpa [#allocation4], 0
    // Predicated region
    $region2: #{tpu_custom_call.1} parent=1 // pred_check
      _
    $region3: #{tpu_custom_call.1} parent=1 // pred_check_branch
      %16 = sbr.rel (0) target = $region5
    $region4: #{tpu_custom_call.1} parent=1 // pred_region
      _
    $region5: #{tpu_custom_call.1} parent=1 // pred_fallthru
      _
    // Predicated region
    $region6: #{tpu_custom_call.1} parent=1 // pred_check
      _
    $region7: #{tpu_custom_call.1} parent=1 // pred_check_branch
      %18 = sbr.rel (0) target = $region9
    $region8: #{tpu_custom_call.1} parent=1 // pred_region
      _
    $region9: #{tpu_custom_call.1} parent=1 // pred_fallthru
      _
    // Predicated region
    $region10: #{tpu_custom_call.1} parent=1 // pred_check
      _
    $region11: #{tpu_custom_call.1} parent=1 // pred_check_branch
      %20 = sbr.rel (0) target = $region13
    $region12: #{tpu_custom_call.1} parent=1 // pred_region
      _
    $region13: #{tpu_custom_call.1} parent=1 // pred_fallthru
      _
    // Predicated region
    $region14: #{tpu_custom_call.1} parent=1 // pred_check
      _
    $region15: #{tpu_custom_call.1} parent=1 // pred_check_branch
      %22 = sbr.rel (0) target = $region17
    $region16: #{tpu_custom_call.1} parent=1 // pred_region
      _
    $region17: #{tpu_custom_call.1} parent=1 // pred_fallthru
      _
    // Predicated region
    $region18: #{tpu_custom_call.1} parent=1 // pred_check
      _
    $region19: #{tpu_custom_call.1} parent=1 // pred_check_branch
      %24 = sbr.rel (0) target = $region21
    $region20: #{tpu_custom_call.1} parent=1 // pred_region
      _
    $region21: #{tpu_custom_call.1} parent=1 // pred_fallthru
      _
    // Predicated region
    $region22: #{tpu_custom_call.1} parent=1 // pred_check
      _
    $region23: #{tpu_custom_call.1} parent=1 // pred_check_branch
      %26 = sbr.rel (0) target = $region25
    $region24: #{tpu_custom_call.1} parent=1 // pred_region
      _
    $region25: #{tpu_custom_call.1} parent=1 // pred_fallthru
      _
    // Predicated region
    $region26: #{tpu_custom_call.1} parent=1 // pred_check
      _
    $region27: #{tpu_custom_call.1} parent=1 // pred_check_branch
      %28 = sbr.rel (0) target = $region29
    $region28: #{tpu_custom_call.1} parent=1 // pred_region
      _
    $region29: #{tpu_custom_call.1} parent=1 // pred_fallthru
      _
    %v29 = vld [vmem:[%s0] sm:$0xff]
    %v30 = vld [vmem:[%s0 + $0x8] sm:$0xff]
    %v31 = vld [vmem:[%s1] sm:$0xff]
    %v32 = vld [vmem:[%s1 + $0x8] sm:$0xff]
    %v33 = vld [vmem:[%s1 + $0x10] sm:$0xff]
    %v34 = vld [vmem:[%s1 + $0x18] sm:$0xff]
    %v35 = vld [vmem:[%s1 + $0x20] sm:$0xff]
    %v36 = vld [vmem:[%s1 + $0x28] sm:$0xff]
    %v37 = vld [vmem:[%s1 + $0x30] sm:$0xff]
    %v38 = vld [vmem:[%s1 + $0x38] sm:$0xff]
    %40 = vset.pattern.permute.xlu0 0
    %41 = vperm.xlu0 %40, %v31
    %v42 = vpop.permute.xlu0 %41
    %45 = vset.pattern.permute.xlu0 0
    %46 = vperm.xlu0 %45, %v32
    %v47 = vpop.permute.xlu0 %46
    %50 = vset.pattern.permute.xlu0 0
    %51 = vperm.xlu0 %50, %v33
    %v52 = vpop.permute.xlu0 %51
    %55 = vset.pattern.permute.xlu0 0
    %56 = vperm.xlu0 %55, %v34
    %v57 = vpop.permute.xlu0 %56
    %60 = vset.pattern.permute.xlu0 0
    %61 = vperm.xlu0 %60, %v35
    %v62 = vpop.permute.xlu0 %61
    %65 = vset.pattern.permute.xlu0 0
    %66 = vperm.xlu0 %65, %v36
    %v67 = vpop.permute.xlu0 %66
    %70 = vset.pattern.permute.xlu0 0
    %71 = vperm.xlu0 %70, %v37
    %v72 = vpop.permute.xlu0 %71
    %75 = vset.pattern.permute.xlu0 0
    %76 = vperm.xlu0 %75, %v38
    %v77 = vpop.permute.xlu0 %76
    %v81 = vlaneseq
    %v82 = vshrl.u32 %v81, 7
    %v83 = vsub.s32 0, %v82
    %v84 = vrot.slane %v29, %v83
    %v85 = vlaneseq
    %v86 = vshrl.u32 %v85, 7
    %v87 = vsub.s32 4, %v86
    %v88 = vrot.slane %v29, %v87
    %v89 = vlaneseq
    %v90 = vshrl.u32 %v89, 7
    %v91 = vsub.s32 0, %v90
    %v92 = vrot.slane %v30, %v91
    %v93 = vlaneseq
    %v94 = vshrl.u32 %v93, 7
    %v95 = vsub.s32 4, %v94
    %v96 = vrot.slane %v30, %v95
    %v101 = vlaneseq
    %v102 = vshrl.u32 %v101, 7
    %v103 = vsub.s32 0, %v102
    %v104 = vrot.slane %v84, %v103
    %v105 = vlaneseq
    %v106 = vshrl.u32 %v105, 7
    %v107 = vsub.s32 0, %v106
    %v108 = vrot.slane %v88, %v107
    %v109 = vlaneseq
    %v110 = vshrl.u32 %v109, 7
    %v111 = vsub.s32 0, %v110
    %v112 = vrot.slane %v92, %v111
    %v113 = vlaneseq
    %v114 = vshrl.u32 %v113, 7
    %v115 = vsub.s32 0, %v114
    %v116 = vrot.slane %v96, %v115
    %v117 = vmul.f32 %v42, %v104
    %v118 = vmul.f32 %v42, %v108
    %v119 = vmul.f32 %v42, %v112
    %v120 = vmul.f32 %v42, %v116
    %v121 = vmul.f32 %v47, %v104
    %v122 = vmul.f32 %v47, %v108
    %v123 = vmul.f32 %v47, %v112
    %v124 = vmul.f32 %v47, %v116
    %v125 = vmul.f32 %v52, %v104
    %v126 = vmul.f32 %v52, %v108
    %v127 = vmul.f32 %v52, %v112
    %v128 = vmul.f32 %v52, %v116
    %v129 = vmul.f32 %v57, %v104
    %v130 = vmul.f32 %v57, %v108
    %v131 = vmul.f32 %v57, %v112
    %v132 = vmul.f32 %v57, %v116
    %v133 = vmul.f32 %v62, %v104
    %v134 = vmul.f32 %v62, %v108
    %v135 = vmul.f32 %v62, %v112
    %v136 = vmul.f32 %v62, %v116
    %v137 = vmul.f32 %v67, %v104
    %v138 = vmul.f32 %v67, %v108
    %v139 = vmul.f32 %v67, %v112
    %v140 = vmul.f32 %v67, %v116
    %v141 = vmul.f32 %v72, %v104
    %v142 = vmul.f32 %v72, %v108
    %v143 = vmul.f32 %v72, %v112
    %v144 = vmul.f32 %v72, %v116
    %v145 = vmul.f32 %v77, %v104
    %v146 = vmul.f32 %v77, %v108
    %v147 = vmul.f32 %v77, %v112
    %v148 = vmul.f32 %v77, %v116
    %149 = vset.pattern.permute.xlu0 1
    %150 = vperm.xlu0 %149, %v31
    %v151 = vpop.permute.xlu0 %150
    %153 = vset.pattern.permute.xlu0 1
    %154 = vperm.xlu0 %153, %v32
    %v155 = vpop.permute.xlu0 %154
    %157 = vset.pattern.permute.xlu0 1
    %158 = vperm.xlu0 %157, %v33
    %v159 = vpop.permute.xlu0 %158
    %161 = vset.pattern.permute.xlu0 1
    %162 = vperm.xlu0 %161, %v34
    %v163 = vpop.permute.xlu0 %162
    %165 = vset.pattern.permute.xlu0 1
    %166 = vperm.xlu0 %165, %v35
    %v167 = vpop.permute.xlu0 %166
    %169 = vset.pattern.permute.xlu0 1
    %170 = vperm.xlu0 %169, %v36
    %v171 = vpop.permute.xlu0 %170
    %173 = vset.pattern.permute.xlu0 1
    %174 = vperm.xlu0 %173, %v37
    %v175 = vpop.permute.xlu0 %174
    %177 = vset.pattern.permute.xlu0 1
    %178 = vperm.xlu0 %177, %v38
    %v179 = vpop.permute.xlu0 %178
    %v181 = vlaneseq
    %v182 = vshrl.u32 %v181, 7
    %v183 = vsub.s32 1, %v182
    %v184 = vrot.slane %v29, %v183
    %v185 = vlaneseq
    %v186 = vshrl.u32 %v185, 7
    %v187 = vsub.s32 5, %v186
    %v188 = vrot.slane %v29, %v187
    %v189 = vlaneseq
    %v190 = vshrl.u32 %v189, 7
    %v191 = vsub.s32 1, %v190
    %v192 = vrot.slane %v30, %v191
    %v193 = vlaneseq
    %v194 = vshrl.u32 %v193, 7
    %v195 = vsub.s32 5, %v194
    %v196 = vrot.slane %v30, %v195
    %v201 = vlaneseq
    %v202 = vshrl.u32 %v201, 7
    %v203 = vsub.s32 1, %v202
    %v204 = vrot.slane %v184, %v203
    %v205 = vlaneseq
    %v206 = vshrl.u32 %v205, 7
    %v207 = vsub.s32 1, %v206
    %v208 = vrot.slane %v188, %v207
    %v209 = vlaneseq
    %v210 = vshrl.u32 %v209, 7
    %v211 = vsub.s32 1, %v210
    %v212 = vrot.slane %v192, %v211
    %v213 = vlaneseq
    %v214 = vshrl.u32 %v213, 7
    %v215 = vsub.s32 1, %v214
    %v216 = vrot.slane %v196, %v215
    %v217 = vmul.f32 %v151, %v204
    %v218 = vmul.f32 %v151, %v208
    %v219 = vmul.f32 %v151, %v212
    %v220 = vmul.f32 %v151, %v216
    %v221 = vmul.f32 %v155, %v204
    %v222 = vmul.f32 %v155, %v208
    %v223 = vmul.f32 %v155, %v212
    %v224 = vmul.f32 %v155, %v216
    %v225 = vmul.f32 %v159, %v204
    %v226 = vmul.f32 %v159, %v208
    %v227 = vmul.f32 %v159, %v212
    %v228 = vmul.f32 %v159, %v216
    %v229 = vmul.f32 %v163, %v204
    %v230 = vmul.f32 %v163, %v208
    %v231 = vmul.f32 %v163, %v212
    %v232 = vmul.f32 %v163, %v216
    %v233 = vmul.f32 %v167, %v204
    %v234 = vmul.f32 %v167, %v208
    %v235 = vmul.f32 %v167, %v212
    %v236 = vmul.f32 %v167, %v216
    %v237 = vmul.f32 %v171, %v204
    %v238 = vmul.f32 %v171, %v208
    %v239 = vmul.f32 %v171, %v212
    %v240 = vmul.f32 %v171, %v216
    %v241 = vmul.f32 %v175, %v204
    %v242 = vmul.f32 %v175, %v208
    %v243 = vmul.f32 %v175, %v212
    %v244 = vmul.f32 %v175, %v216
    %v245 = vmul.f32 %v179, %v204
    %v246 = vmul.f32 %v179, %v208
    %v247 = vmul.f32 %v179, %v212
    %v248 = vmul.f32 %v179, %v216
    %v249 = vadd.f32 %v117, %v217
    %v250 = vadd.f32 %v118, %v218
    %v251 = vadd.f32 %v119, %v219
    %v252 = vadd.f32 %v120, %v220
    %v253 = vadd.f32 %v121, %v221
    %v254 = vadd.f32 %v122, %v222
    %v255 = vadd.f32 %v123, %v223
    %v256 = vadd.f32 %v124, %v224
    %v257 = vadd.f32 %v125, %v225
    %v258 = vadd.f32 %v126, %v226
    %v259 = vadd.f32 %v127, %v227
    %v260 = vadd.f32 %v128, %v228
    %v261 = vadd.f32 %v129, %v229
    %v262 = vadd.f32 %v130, %v230
    %v263 = vadd.f32 %v131, %v231
    %v264 = vadd.f32 %v132, %v232
    %v265 = vadd.f32 %v133, %v233
    %v266 = vadd.f32 %v134, %v234
    %v267 = vadd.f32 %v135, %v235
    %v268 = vadd.f32 %v136, %v236
    %v269 = vadd.f32 %v137, %v237
    %v270 = vadd.f32 %v138, %v238
    %v271 = vadd.f32 %v139, %v239
    %v272 = vadd.f32 %v140, %v240
    %v273 = vadd.f32 %v141, %v241
    %v274 = vadd.f32 %v142, %v242
    %v275 = vadd.f32 %v143, %v243
    %v276 = vadd.f32 %v144, %v244
    %v277 = vadd.f32 %v145, %v245
    %v278 = vadd.f32 %v146, %v246
    %v279 = vadd.f32 %v147, %v247
    %v280 = vadd.f32 %v148, %v248
    %281 = vset.pattern.permute.xlu0 2
    %282 = vperm.xlu0 %281, %v31
    %v283 = vpop.permute.xlu0 %282
    %285 = vset.pattern.permute.xlu0 2
    %286 = vperm.xlu0 %285, %v32
    %v287 = vpop.permute.xlu0 %286
    %289 = vset.pattern.permute.xlu0 2
    %290 = vperm.xlu0 %289, %v33
    %v291 = vpop.permute.xlu0 %290
    %293 = vset.pattern.permute.xlu0 2
    %294 = vperm.xlu0 %293, %v34
    %v295 = vpop.permute.xlu0 %294
    %297 = vset.pattern.permute.xlu0 2
    %298 = vperm.xlu0 %297, %v35
    %v299 = vpop.permute.xlu0 %298
    %301 = vset.pattern.permute.xlu0 2
    %302 = vperm.xlu0 %301, %v36
    %v303 = vpop.permute.xlu0 %302
    %305 = vset.pattern.permute.xlu0 2
    %306 = vperm.xlu0 %305, %v37
    %v307 = vpop.permute.xlu0 %306
    %309 = vset.pattern.permute.xlu0 2
    %310 = vperm.xlu0 %309, %v38
    %v311 = vpop.permute.xlu0 %310
    %v313 = vlaneseq
    %v314 = vshrl.u32 %v313, 7
    %v315 = vsub.s32 2, %v314
    %v316 = vrot.slane %v29, %v315
    %v317 = vlaneseq
    %v318 = vshrl.u32 %v317, 7
    %v319 = vsub.s32 6, %v318
    %v320 = vrot.slane %v29, %v319
    %v321 = vlaneseq
    %v322 = vshrl.u32 %v321, 7
    %v323 = vsub.s32 2, %v322
    %v324 = vrot.slane %v30, %v323
    %v325 = vlaneseq
    %v326 = vshrl.u32 %v325, 7
    %v327 = vsub.s32 6, %v326
    %v328 = vrot.slane %v30, %v327
    %v333 = vlaneseq
    %v334 = vshrl.u32 %v333, 7
    %v335 = vsub.s32 2, %v334
    %v336 = vrot.slane %v316, %v335
    %v337 = vlaneseq
    %v338 = vshrl.u32 %v337, 7
    %v339 = vsub.s32 2, %v338
    %v340 = vrot.slane %v320, %v339
    %v341 = vlaneseq
    %v342 = vshrl.u32 %v341, 7
    %v343 = vsub.s32 2, %v342
    %v344 = vrot.slane %v324, %v343
    %v345 = vlaneseq
    %v346 = vshrl.u32 %v345, 7
    %v347 = vsub.s32 2, %v346
    %v348 = vrot.slane %v328, %v347
    %v349 = vmul.f32 %v283, %v336
    %v350 = vmul.f32 %v283, %v340
    %v351 = vmul.f32 %v283, %v344
    %v352 = vmul.f32 %v283, %v348
    %v353 = vmul.f32 %v287, %v336
    %v354 = vmul.f32 %v287, %v340
    %v355 = vmul.f32 %v287, %v344
    %v356 = vmul.f32 %v287, %v348
    %v357 = vmul.f32 %v291, %v336
    %v358 = vmul.f32 %v291, %v340
    %v359 = vmul.f32 %v291, %v344
    %v360 = vmul.f32 %v291, %v348
    %v361 = vmul.f32 %v295, %v336
    %v362 = vmul.f32 %v295, %v340
    %v363 = vmul.f32 %v295, %v344
    %v364 = vmul.f32 %v295, %v348
    %v365 = vmul.f32 %v299, %v336
    %v366 = vmul.f32 %v299, %v340
    %v367 = vmul.f32 %v299, %v344
    %v368 = vmul.f32 %v299, %v348
    %v369 = vmul.f32 %v303, %v336
    %v370 = vmul.f32 %v303, %v340
    %v371 = vmul.f32 %v303, %v344
    %v372 = vmul.f32 %v303, %v348
    %v373 = vmul.f32 %v307, %v336
    %v374 = vmul.f32 %v307, %v340
    %v375 = vmul.f32 %v307, %v344
    %v376 = vmul.f32 %v307, %v348
    %v377 = vmul.f32 %v311, %v336
    %v378 = vmul.f32 %v311, %v340
    %v379 = vmul.f32 %v311, %v344
    %v380 = vmul.f32 %v311, %v348
    %v381 = vadd.f32 %v249, %v349
    %v382 = vadd.f32 %v250, %v350
    %v383 = vadd.f32 %v251, %v351
    %v384 = vadd.f32 %v252, %v352
    %v385 = vadd.f32 %v253, %v353
    %v386 = vadd.f32 %v254, %v354
    %v387 = vadd.f32 %v255, %v355
    %v388 = vadd.f32 %v256, %v356
    %v389 = vadd.f32 %v257, %v357
    %v390 = vadd.f32 %v258, %v358
    %v391 = vadd.f32 %v259, %v359
    %v392 = vadd.f32 %v260, %v360
    %v393 = vadd.f32 %v261, %v361
    %v394 = vadd.f32 %v262, %v362
    %v395 = vadd.f32 %v263, %v363
    %v396 = vadd.f32 %v264, %v364
    %v397 = vadd.f32 %v265, %v365
    %v398 = vadd.f32 %v266, %v366
    %v399 = vadd.f32 %v267, %v367
    %v400 = vadd.f32 %v268, %v368
    %v401 = vadd.f32 %v269, %v369
    %v402 = vadd.f32 %v270, %v370
    %v403 = vadd.f32 %v271, %v371
    %v404 = vadd.f32 %v272, %v372
    %v405 = vadd.f32 %v273, %v373
    %v406 = vadd.f32 %v274, %v374
    %v407 = vadd.f32 %v275, %v375
    %v408 = vadd.f32 %v276, %v376
    %v409 = vadd.f32 %v277, %v377
    %v410 = vadd.f32 %v278, %v378
    %v411 = vadd.f32 %v279, %v379
    %v412 = vadd.f32 %v280, %v380
    %413 = vset.pattern.permute.xlu0 3
    %414 = vperm.xlu0 %413, %v31
    %v415 = vpop.permute.xlu0 %414
    %417 = vset.pattern.permute.xlu0 3
    %418 = vperm.xlu0 %417, %v32
    %v419 = vpop.permute.xlu0 %418
    %421 = vset.pattern.permute.xlu0 3
    %422 = vperm.xlu0 %421, %v33
    %v423 = vpop.permute.xlu0 %422
    %425 = vset.pattern.permute.xlu0 3
    %426 = vperm.xlu0 %425, %v34
    %v427 = vpop.permute.xlu0 %426
    %429 = vset.pattern.permute.xlu0 3
    %430 = vperm.xlu0 %429, %v35
    %v431 = vpop.permute.xlu0 %430
    %433 = vset.pattern.permute.xlu0 3
    %434 = vperm.xlu0 %433, %v36
    %v435 = vpop.permute.xlu0 %434
    %437 = vset.pattern.permute.xlu0 3
    %438 = vperm.xlu0 %437, %v37
    %v439 = vpop.permute.xlu0 %438
    %441 = vset.pattern.permute.xlu0 3
    %442 = vperm.xlu0 %441, %v38
    %v443 = vpop.permute.xlu0 %442
    %v445 = vlaneseq
    %v446 = vshrl.u32 %v445, 7
    %v447 = vsub.s32 3, %v446
    %v448 = vrot.slane %v29, %v447
    %v449 = vlaneseq
    %v450 = vshrl.u32 %v449, 7
    %v451 = vsub.s32 7, %v450
    %v452 = vrot.slane %v29, %v451
    %v453 = vlaneseq
    %v454 = vshrl.u32 %v453, 7
    %v455 = vsub.s32 3, %v454
    %v456 = vrot.slane %v30, %v455
    %v457 = vlaneseq
    %v458 = vshrl.u32 %v457, 7
    %v459 = vsub.s32 7, %v458
    %v460 = vrot.slane %v30, %v459
    %v465 = vlaneseq
    %v466 = vshrl.u32 %v465, 7
    %v467 = vsub.s32 3, %v466
    %v468 = vrot.slane %v448, %v467
    %v469 = vlaneseq
    %v470 = vshrl.u32 %v469, 7
    %v471 = vsub.s32 3, %v470
    %v472 = vrot.slane %v452, %v471
    %v473 = vlaneseq
    %v474 = vshrl.u32 %v473, 7
    %v475 = vsub.s32 3, %v474
    %v476 = vrot.slane %v456, %v475
    %v477 = vlaneseq
    %v478 = vshrl.u32 %v477, 7
    %v479 = vsub.s32 3, %v478
    %v480 = vrot.slane %v460, %v479
    %v481 = vmul.f32 %v415, %v468
    %v482 = vmul.f32 %v415, %v472
    %v483 = vmul.f32 %v415, %v476
    %v484 = vmul.f32 %v415, %v480
    %v485 = vmul.f32 %v419, %v468
    %v486 = vmul.f32 %v419, %v472
    %v487 = vmul.f32 %v419, %v476
    %v488 = vmul.f32 %v419, %v480
    %v489 = vmul.f32 %v423, %v468
    %v490 = vmul.f32 %v423, %v472
    %v491 = vmul.f32 %v423, %v476
    %v492 = vmul.f32 %v423, %v480
    %v493 = vmul.f32 %v427, %v468
    %v494 = vmul.f32 %v427, %v472
    %v495 = vmul.f32 %v427, %v476
    %v496 = vmul.f32 %v427, %v480
    %v497 = vmul.f32 %v431, %v468
    %v498 = vmul.f32 %v431, %v472
    %v499 = vmul.f32 %v431, %v476
    %v500 = vmul.f32 %v431, %v480
    %v501 = vmul.f32 %v435, %v468
    %v502 = vmul.f32 %v435, %v472
    %v503 = vmul.f32 %v435, %v476
    %v504 = vmul.f32 %v435, %v480
    %v505 = vmul.f32 %v439, %v468
    %v506 = vmul.f32 %v439, %v472
    %v507 = vmul.f32 %v439, %v476
    %v508 = vmul.f32 %v439, %v480
    %v509 = vmul.f32 %v443, %v468
    %v510 = vmul.f32 %v443, %v472
    %v511 = vmul.f32 %v443, %v476
    %v512 = vmul.f32 %v443, %v480
    %v513 = vadd.f32 %v381, %v481
    %v514 = vadd.f32 %v382, %v482
    %v515 = vadd.f32 %v383, %v483
    %v516 = vadd.f32 %v384, %v484
    %v517 = vadd.f32 %v385, %v485
    %v518 = vadd.f32 %v386, %v486
    %v519 = vadd.f32 %v387, %v487
    %v520 = vadd.f32 %v388, %v488
    %v521 = vadd.f32 %v389, %v489
    %v522 = vadd.f32 %v390, %v490
    %v523 = vadd.f32 %v391, %v491
    %v524 = vadd.f32 %v392, %v492
    %v525 = vadd.f32 %v393, %v493
    %v526 = vadd.f32 %v394, %v494
    %v527 = vadd.f32 %v395, %v495
    %v528 = vadd.f32 %v396, %v496
    %v529 = vadd.f32 %v397, %v497
    %v530 = vadd.f32 %v398, %v498
    %v531 = vadd.f32 %v399, %v499
    %v532 = vadd.f32 %v400, %v500
    %v533 = vadd.f32 %v401, %v501
    %v534 = vadd.f32 %v402, %v502
    %v535 = vadd.f32 %v403, %v503
    %v536 = vadd.f32 %v404, %v504
    %v537 = vadd.f32 %v405, %v505
    %v538 = vadd.f32 %v406, %v506
    %v539 = vadd.f32 %v407, %v507
    %v540 = vadd.f32 %v408, %v508
    %v541 = vadd.f32 %v409, %v509
    %v542 = vadd.f32 %v410, %v510
    %v543 = vadd.f32 %v411, %v511
    %v544 = vadd.f32 %v412, %v512
    %v545 = vld [vmem:[%s2] sm:$0xff]
    %v546 = vld [vmem:[%s2 + $0x8] sm:$0xff]
    %v547 = vld [vmem:[%s2 + $0x10] sm:$0xff]
    %v548 = vld [vmem:[%s2 + $0x18] sm:$0xff]
    %v549 = vld [vmem:[%s2 + $0x20] sm:$0xff]
    %v550 = vld [vmem:[%s2 + $0x28] sm:$0xff]
    %v551 = vld [vmem:[%s2 + $0x30] sm:$0xff]
    %v552 = vld [vmem:[%s2 + $0x38] sm:$0xff]
    %554 = vset.pattern.permute.xlu0 0
    %555 = vperm.xlu0 %554, %v545
    %v556 = vpop.permute.xlu0 %555
    %559 = vset.pattern.permute.xlu0 0
    %560 = vperm.xlu0 %559, %v546
    %v561 = vpop.permute.xlu0 %560
    %564 = vset.pattern.permute.xlu0 0
    %565 = vperm.xlu0 %564, %v547
    %v566 = vpop.permute.xlu0 %565
    %569 = vset.pattern.permute.xlu0 0
    %570 = vperm.xlu0 %569, %v548
    %v571 = vpop.permute.xlu0 %570
    %574 = vset.pattern.permute.xlu0 0
    %575 = vperm.xlu0 %574, %v549
    %v576 = vpop.permute.xlu0 %575
    %579 = vset.pattern.permute.xlu0 0
    %580 = vperm.xlu0 %579, %v550
    %v581 = vpop.permute.xlu0 %580
    %584 = vset.pattern.permute.xlu0 0
    %585 = vperm.xlu0 %584, %v551
    %v586 = vpop.permute.xlu0 %585
    %589 = vset.pattern.permute.xlu0 0
    %590 = vperm.xlu0 %589, %v552
    %v591 = vpop.permute.xlu0 %590
    %v593 = vadd.f32 %v513, %v556
    %v594 = vadd.f32 %v514, %v556
    %v595 = vadd.f32 %v515, %v556
    %v596 = vadd.f32 %v516, %v556
    %v597 = vadd.f32 %v517, %v561
    %v598 = vadd.f32 %v518, %v561
    %v599 = vadd.f32 %v519, %v561
    %v600 = vadd.f32 %v520, %v561
    %v601 = vadd.f32 %v521, %v566
    %v602 = vadd.f32 %v522, %v566
    %v603 = vadd.f32 %v523, %v566
    %v604 = vadd.f32 %v524, %v566
    %v605 = vadd.f32 %v525, %v571
    %v606 = vadd.f32 %v526, %v571
    %v607 = vadd.f32 %v527, %v571
    %v608 = vadd.f32 %v528, %v571
    %v609 = vadd.f32 %v529, %v576
    %v610 = vadd.f32 %v530, %v576
    %v611 = vadd.f32 %v531, %v576
    %v612 = vadd.f32 %v532, %v576
    %v613 = vadd.f32 %v533, %v581
    %v614 = vadd.f32 %v534, %v581
    %v615 = vadd.f32 %v535, %v581
    %v616 = vadd.f32 %v536, %v581
    %v617 = vadd.f32 %v537, %v586
    %v618 = vadd.f32 %v538, %v586
    %v619 = vadd.f32 %v539, %v586
    %v620 = vadd.f32 %v540, %v586
    %v621 = vadd.f32 %v541, %v591
    %v622 = vadd.f32 %v542, %v591
    %v623 = vadd.f32 %v543, %v591
    %v624 = vadd.f32 %v544, %v591
    %v625 = vmax.f32 %v593, 0.0
    %v626 = vmax.f32 %v594, 0.0
    %v627 = vmax.f32 %v595, 0.0
    %v628 = vmax.f32 %v596, 0.0
    %v629 = vmax.f32 %v597, 0.0
    %v630 = vmax.f32 %v598, 0.0
    %v631 = vmax.f32 %v599, 0.0
    %v632 = vmax.f32 %v600, 0.0
    %v633 = vmax.f32 %v601, 0.0
    %v634 = vmax.f32 %v602, 0.0
    %v635 = vmax.f32 %v603, 0.0
    %v636 = vmax.f32 %v604, 0.0
    %v637 = vmax.f32 %v605, 0.0
    %v638 = vmax.f32 %v606, 0.0
    %v639 = vmax.f32 %v607, 0.0
    %v640 = vmax.f32 %v608, 0.0
    %v641 = vmax.f32 %v609, 0.0
    %v642 = vmax.f32 %v610, 0.0
    %v643 = vmax.f32 %v611, 0.0
    %v644 = vmax.f32 %v612, 0.0
    %v645 = vmax.f32 %v613, 0.0
    %v646 = vmax.f32 %v614, 0.0
    %v647 = vmax.f32 %v615, 0.0
    %v648 = vmax.f32 %v616, 0.0
    %v649 = vmax.f32 %v617, 0.0
    %v650 = vmax.f32 %v618, 0.0
    %v651 = vmax.f32 %v619, 0.0
    %v652 = vmax.f32 %v620, 0.0
    %v653 = vmax.f32 %v621, 0.0
    %v654 = vmax.f32 %v622, 0.0
    %v655 = vmax.f32 %v623, 0.0
    %v656 = vmax.f32 %v624, 0.0
    %v657 = vld [vmem:[%s3] sm:$0xff]
    %v658 = vld [vmem:[%s3 + $0x8] sm:$0xff]
    %v659 = vld [vmem:[%s3 + $0x10] sm:$0xff]
    %v660 = vld [vmem:[%s3 + $0x18] sm:$0xff]
    %v661 = vld [vmem:[%s4] sm:$0xff]
    %v662 = vld [vmem:[%s4 + $0x8] sm:$0xff]
    %v663 = vld [vmem:[%s4 + $0x10] sm:$0xff]
    %v664 = vld [vmem:[%s4 + $0x18] sm:$0xff]
    %666 = vset.pattern.permute.xlu0 0
    %667 = vperm.xlu0 %666, %v661
    %v668 = vpop.permute.xlu0 %667
    %671 = vset.pattern.permute.xlu0 0
    %672 = vperm.xlu0 %671, %v662
    %v673 = vpop.permute.xlu0 %672
    %676 = vset.pattern.permute.xlu0 0
    %677 = vperm.xlu0 %676, %v663
    %v678 = vpop.permute.xlu0 %677
    %681 = vset.pattern.permute.xlu0 0
    %682 = vperm.xlu0 %681, %v664
    %v683 = vpop.permute.xlu0 %682
    %vm685 = vcmask 523264
    %v687 = vsel %vm685, %v657, 0
    %v690 = vsel %vm685, %v658, 0
    %v693 = vsel %vm685, %v659, 0
    %v696 = vsel %vm685, %v660, 0
    %698 = vmatprep.subr.mxu0 %v626
    %699 = vmatpush1.msra.mxu0 %v625
    %700 = vmatprep.subr.mxu0 %v630
    %701 = vmatpush1.msra.mxu0 %v629
    %702 = vmatprep.subr.mxu0 %v634
    %703 = vmatpush1.msra.mxu0 %v633
    %704 = vmatprep.subr.mxu0 %v638
    %705 = vmatpush1.msra.mxu0 %v637
    %706 = vmatprep.subr.mxu0 %v642
    %707 = vmatpush1.msra.mxu0 %v641
    %708 = vmatprep.subr.mxu0 %v646
    %709 = vmatpush1.msra.mxu0 %v645
    %710 = vmatprep.subr.mxu0 %v650
    %711 = vmatpush1.msra.mxu0 %v649
    %712 = vmatprep.subr.mxu0 %v654
    %713 = vmatpush1.msra.mxu0 %v653
    %714 = vmatprep.subr.mxu0 0.0
    %715 = vmatpush1.msra.mxu0 0.0
    %716 = vmatprep.subr.mxu0 0.0
    %717 = vmatpush1.msra.mxu0 0.0
    %718 = vmatprep.subr.mxu0 0.0
    %719 = vmatpush1.msra.mxu0 0.0
    %720 = vmatprep.subr.mxu0 0.0
    %721 = vmatpush1.msra.mxu0 0.0
    %722 = vmatprep.subr.mxu0 0.0
    %723 = vmatpush1.msra.mxu0 0.0
    %724 = vmatprep.subr.mxu0 0.0
    %725 = vmatpush1.msra.mxu0 0.0
    %726 = vmatprep.subr.mxu0 0.0
    %727 = vmatpush1.msra.mxu0 0.0
    %728 = vmatprep.subr.mxu0 0.0
    %729 = vmatpush1.msra.mxu0 0.0
    %730 = vmatprep.subr.mxu0 0.0
    %731 = vmatpush1.msra.mxu0 0.0
    %732 = vmatprep.subr.mxu0 0.0
    %733 = vmatpush1.msra.mxu0 0.0
    %734 = vmatprep.subr.mxu0 0.0
    %735 = vmatpush1.msra.mxu0 0.0
    %736 = vmatprep.subr.mxu0 0.0
    %737 = vmatpush1.msra.mxu0 0.0
    %738 = vmatprep.subr.mxu0 0.0
    %739 = vmatpush1.msra.mxu0 0.0
    %740 = vmatprep.subr.mxu0 0.0
    %741 = vmatpush1.msra.mxu0 0.0
    %742 = vmatprep.subr.mxu0 0.0
    %743 = vmatpush1.msra.mxu0 0.0
    %744 = vmatprep.subr.mxu0 0.0
    %745 = vmatpush1.msra.mxu0 0.0
    %746 = vmatprep.subr.mxu0 0.0
    %747 = vmatpush1.msra.mxu0 0.0
    %748 = vmatprep.subr.mxu0 0.0
    %749 = vmatpush1.msra.mxu0 0.0
    %750 = vmatprep.subr.mxu0 0.0
    %751 = vmatpush1.msra.mxu0 0.0
    %752 = vmatprep.subr.mxu0 0.0
    %753 = vmatpush1.msra.mxu0 0.0
    %754 = vmatprep.subr.mxu0 0.0
    %755 = vmatpush1.msra.mxu0 0.0
    %756 = vmatprep.subr.mxu0 0.0
    %757 = vmatpush1.msra.mxu0 0.0
    %758 = vmatprep.subr.mxu0 0.0
    %759 = vmatpush1.msra.mxu0 0.0
    %760 = vmatprep.subr.mxu0 0.0
    %761 = vmatpush1.msra.mxu0 0.0
    %762 = vmatprep.mubr.f32.mxu0 0.0
    %763 = vmatmul.mubr.f32.gmra.mrb[0].mxu0 %v687
    %v764 = vpop.f32.mrb[0].mxu0
    %v765 = vadd.f32 %v668, %v764
    %v766 = vpop.f32.mrb[0].mxu0
    %v767 = vadd.f32 %v668, %v766
    %768 = vmatprep.mubr.f32.mxu0 0.0
    %769 = vmatmul.mubr.f32.gmra.mrb[0].mxu0 %v690
    %v770 = vpop.f32.mrb[0].mxu0
    %v771 = vadd.f32 %v673, %v770
    %v772 = vpop.f32.mrb[0].mxu0
    %v773 = vadd.f32 %v673, %v772
    %774 = vmatprep.mubr.f32.mxu0 0.0
    %775 = vmatmul.mubr.f32.gmra.mrb[0].mxu0 %v693
    %v776 = vpop.f32.mrb[0].mxu0
    %v777 = vadd.f32 %v678, %v776
    %v778 = vpop.f32.mrb[0].mxu0
    %v779 = vadd.f32 %v678, %v778
    %780 = vmatprep.mubr.f32.mxu0 0.0
    %781 = vmatmul.mubr.f32.gmra.mrb[0].mxu0 %v696
    %v782 = vpop.f32.mrb[0].mxu0
    %v783 = vadd.f32 %v683, %v782
    %v784 = vpop.f32.mrb[0].mxu0
    %v785 = vadd.f32 %v683, %v784
    %786 = vdwg.mxu0
    %787 = vmatprep.subr.mxu0 %v628
    %788 = vmatpush1.msra.mxu0 %v627
    %789 = vmatprep.subr.mxu0 %v632
    %790 = vmatpush1.msra.mxu0 %v631
    %791 = vmatprep.subr.mxu0 %v636
    %792 = vmatpush1.msra.mxu0 %v635
    %793 = vmatprep.subr.mxu0 %v640
    %794 = vmatpush1.msra.mxu0 %v639
    %795 = vmatprep.subr.mxu0 %v644
    %796 = vmatpush1.msra.mxu0 %v643
    %797 = vmatprep.subr.mxu0 %v648
    %798 = vmatpush1.msra.mxu0 %v647
    %799 = vmatprep.subr.mxu0 %v652
    %800 = vmatpush1.msra.mxu0 %v651
    %801 = vmatprep.subr.mxu0 %v656
    %802 = vmatpush1.msra.mxu0 %v655
    %803 = vmatprep.subr.mxu0 0.0
    %804 = vmatpush1.msra.mxu0 0.0
    %805 = vmatprep.subr.mxu0 0.0
    %806 = vmatpush1.msra.mxu0 0.0
    %807 = vmatprep.subr.mxu0 0.0
    %808 = vmatpush1.msra.mxu0 0.0
    %809 = vmatprep.subr.mxu0 0.0
    %810 = vmatpush1.msra.mxu0 0.0
    %811 = vmatprep.subr.mxu0 0.0
    %812 = vmatpush1.msra.mxu0 0.0
    %813 = vmatprep.subr.mxu0 0.0
    %814 = vmatpush1.msra.mxu0 0.0
    %815 = vmatprep.subr.mxu0 0.0
    %816 = vmatpush1.msra.mxu0 0.0
    %817 = vmatprep.subr.mxu0 0.0
    %818 = vmatpush1.msra.mxu0 0.0
    %819 = vmatprep.subr.mxu0 0.0
    %820 = vmatpush1.msra.mxu0 0.0
    %821 = vmatprep.subr.mxu0 0.0
    %822 = vmatpush1.msra.mxu0 0.0
    %823 = vmatprep.subr.mxu0 0.0
    %824 = vmatpush1.msra.mxu0 0.0
    %825 = vmatprep.subr.mxu0 0.0
    %826 = vmatpush1.msra.mxu0 0.0
    %827 = vmatprep.subr.mxu0 0.0
    %828 = vmatpush1.msra.mxu0 0.0
    %829 = vmatprep.subr.mxu0 0.0
    %830 = vmatpush1.msra.mxu0 0.0
    %831 = vmatprep.subr.mxu0 0.0
    %832 = vmatpush1.msra.mxu0 0.0
    %833 = vmatprep.subr.mxu0 0.0
    %834 = vmatpush1.msra.mxu0 0.0
    %835 = vmatprep.subr.mxu0 0.0
    %836 = vmatpush1.msra.mxu0 0.0
    %837 = vmatprep.subr.mxu0 0.0
    %838 = vmatpush1.msra.mxu0 0.0
    %839 = vmatprep.subr.mxu0 0.0
    %840 = vmatpush1.msra.mxu0 0.0
    %841 = vmatprep.subr.mxu0 0.0
    %842 = vmatpush1.msra.mxu0 0.0
    %843 = vmatprep.subr.mxu0 0.0
    %844 = vmatpush1.msra.mxu0 0.0
    %845 = vmatprep.subr.mxu0 0.0
    %846 = vmatpush1.msra.mxu0 0.0
    %847 = vmatprep.subr.mxu0 0.0
    %848 = vmatpush1.msra.mxu0 0.0
    %849 = vmatprep.subr.mxu0 0.0
    %850 = vmatpush1.msra.mxu0 0.0
    %851 = vmatprep.mubr.f32.mxu0 0.0
    %852 = vmatmul.mubr.f32.gmra.mrb[0].mxu0 %v687
    %v853 = vpop.f32.mrb[0].mxu0
    %v854 = vadd.f32 %v668, %v853
    %v855 = vpop.f32.mrb[0].mxu0
    %v856 = vadd.f32 %v668, %v855
    %857 = vmatprep.mubr.f32.mxu0 0.0
    %858 = vmatmul.mubr.f32.gmra.mrb[0].mxu0 %v690
    %v859 = vpop.f32.mrb[0].mxu0
    %v860 = vadd.f32 %v673, %v859
    %v861 = vpop.f32.mrb[0].mxu0
    %v862 = vadd.f32 %v673, %v861
    %863 = vmatprep.mubr.f32.mxu0 0.0
    %864 = vmatmul.mubr.f32.gmra.mrb[0].mxu0 %v693
    %v865 = vpop.f32.mrb[0].mxu0
    %v866 = vadd.f32 %v678, %v865
    %v867 = vpop.f32.mrb[0].mxu0
    %v868 = vadd.f32 %v678, %v867
    %869 = vmatprep.mubr.f32.mxu0 0.0
    %870 = vmatmul.mubr.f32.gmra.mrb[0].mxu0 %v696
    %v871 = vpop.f32.mrb[0].mxu0
    %v872 = vadd.f32 %v683, %v871
    %v873 = vpop.f32.mrb[0].mxu0
    %v874 = vadd.f32 %v683, %v873
    %875 = vdwg.mxu0
    %v876 = vmax.f32 %v765, 0.0
    %v877 = vmax.f32 %v767, 0.0
    %v878 = vmax.f32 %v854, 0.0
    %v879 = vmax.f32 %v856, 0.0
    %v880 = vmax.f32 %v771, 0.0
    %v881 = vmax.f32 %v773, 0.0
    %v882 = vmax.f32 %v860, 0.0
    %v883 = vmax.f32 %v862, 0.0
    %v884 = vmax.f32 %v777, 0.0
    %v885 = vmax.f32 %v779, 0.0
    %v886 = vmax.f32 %v866, 0.0
    %v887 = vmax.f32 %v868, 0.0
    %v888 = vmax.f32 %v783, 0.0
    %v889 = vmax.f32 %v785, 0.0
    %v890 = vmax.f32 %v872, 0.0
    %v891 = vmax.f32 %v874, 0.0
    %v892 = vld [vmem:[%s5] sm:$0xff]
    %v893 = vld [vmem:[%s5 + $0x8] sm:$0xff]
    %v894 = vld [vmem:[%s5 + $0x10] sm:$0xff]
    %v895 = vld [vmem:[%s5 + $0x18] sm:$0xff]
    %897 = vset.pattern.permute.xlu0 0
    %898 = vperm.xlu0 %897, %v892
    %v899 = vpop.permute.xlu0 %898
    %902 = vset.pattern.permute.xlu0 0
    %903 = vperm.xlu0 %902, %v893
    %v904 = vpop.permute.xlu0 %903
    %907 = vset.pattern.permute.xlu0 0
    %908 = vperm.xlu0 %907, %v894
    %v909 = vpop.permute.xlu0 %908
    %912 = vset.pattern.permute.xlu0 0
    %913 = vperm.xlu0 %912, %v895
    %v914 = vpop.permute.xlu0 %913
    %v916 = vmul.f32 %v899, %v876
    %v917 = vmul.f32 %v899, %v877
    %v918 = vmul.f32 %v899, %v878
    %v919 = vmul.f32 %v899, %v879
    %v920 = vmul.f32 %v904, %v880
    %v921 = vmul.f32 %v904, %v881
    %v922 = vmul.f32 %v904, %v882
    %v923 = vmul.f32 %v904, %v883
    %v924 = vmul.f32 %v909, %v884
    %v925 = vmul.f32 %v909, %v885
    %v926 = vmul.f32 %v909, %v886
    %v927 = vmul.f32 %v909, %v887
    %v928 = vmul.f32 %v914, %v888
    %v929 = vmul.f32 %v914, %v889
    %v930 = vmul.f32 %v914, %v890
    %v931 = vmul.f32 %v914, %v891
    %v932 = vadd.f32 %v916, %v920
    %v933 = vadd.f32 %v932, %v924
    %v934 = vadd.f32 %v933, %v928
    %v935 = vrot.slane %v934, 4
    %v936 = vadd.f32 %v934, %v935
    %v937 = vrot.slane %v936, 2
    %v938 = vadd.f32 %v936, %v937
    %v939 = vrot.slane %v938, 1
    %v940 = vadd.f32 %v938, %v939
    %v941 = vadd.f32 %v917, %v921
    %v942 = vadd.f32 %v941, %v925
    %v943 = vadd.f32 %v942, %v929
    %v944 = vrot.slane %v943, 4
    %v945 = vadd.f32 %v943, %v944
    %v946 = vrot.slane %v945, 2
    %v947 = vadd.f32 %v945, %v946
    %v948 = vrot.slane %v947, 1
    %v949 = vadd.f32 %v947, %v948
    %v950 = vadd.f32 %v918, %v922
    %v951 = vadd.f32 %v950, %v926
    %v952 = vadd.f32 %v951, %v930
    %v953 = vrot.slane %v952, 4
    %v954 = vadd.f32 %v952, %v953
    %v955 = vrot.slane %v954, 2
    %v956 = vadd.f32 %v954, %v955
    %v957 = vrot.slane %v956, 1
    %v958 = vadd.f32 %v956, %v957
    %v959 = vadd.f32 %v919, %v923
    %v960 = vadd.f32 %v959, %v927
    %v961 = vadd.f32 %v960, %v931
    %v962 = vrot.slane %v961, 4
    %v963 = vadd.f32 %v961, %v962
    %v964 = vrot.slane %v963, 2
    %v965 = vadd.f32 %v963, %v964
    %v966 = vrot.slane %v965, 1
    %v967 = vadd.f32 %v965, %v966
    %v968 = vld [vmem:[#allocation2] sm:$0x1]
    %970 = vset.pattern.permute.xlu0 0
    %971 = vperm.xlu0 %970, %v968
    %v972 = vpop.permute.xlu0 %971
    %v974 = vlaneseq
    %v975 = vshrl.u32 %v974, 7
    %v976 = vsub.s32 0, %v975
    %v977 = vrot.slane %v972, %v976
    %v978 = vadd.f32 %v940, %v977
    %v979 = vadd.f32 %v949, %v977
    %v980 = vadd.f32 %v958, %v977
    %v981 = vadd.f32 %v967, %v977
    %v986 = vcombine.low %v978, %v979
    %v987 = vcombine.low %v980, %v981
    %v989 = vunpack.c.l.s4 1966171168
    %v990 = vunpack.c.0.s8 %v989
    %v991 = vlaneseq
    %v992 = vshrl.u32 %v991, 7
    %v993 = vsub.s32 %v990, %v992
    %v994 = vrot.slane %v986, %v993
    %v996 = vunpack.c.l.s4 1966171168
    %v997 = vunpack.c.0.s8 %v996
    %v998 = vlaneseq
    %v999 = vshrl.u32 %v998, 7
    %v1000 = vsub.s32 %v997, %v999
    %v1001 = vrot.slane %v987, %v1000
    %v1002 = vcombine.low %v994, %v1001
    %v1004 = vunpack.c.l.s4 1966171168
    %v1005 = vunpack.c.0.s8 %v1004
    %v1006 = vlaneseq
    %v1007 = vshrl.u32 %v1006, 7
    %v1008 = vsub.s32 %v1005, %v1007
    %v1009 = vrot.slane %v1002, %v1008
    %v1011 = vlaneseq
    %vm1012 = vcmp.ge.s32.totalorder %v1011, 0
    %vm1013 = vcmp.lt.s32.totalorder %v1011, 512
    %vm1014 = vmand %vm1012, %vm1013
    %1015 = vst.msk [vmem:[#allocation3] sm:$0xf] %vm1014, %v1009
    // Predicated region
    $region30: #{tpu_custom_call.1} parent=1 // pred_check
      _
    $region31: #{tpu_custom_call.1} parent=1 // pred_check_branch
      %1017 = sbr.rel (0) target = $region33
    $region32: #{tpu_custom_call.1} parent=1 // pred_region
      %s1019 = ssub.s32 64, 64
      %1020 = vsyncadd [#allocation4], %s1019
      %s1022 = sshll.u32 [#allocation3], 4
      %s1023 = int_to_ptr.vmem [resolvable:$true] %s1022
      %1025 = dma.vmem_to_hbm [thread:$0]  %s1023, 64, %s7, [#allocation4]
    $region33: #{tpu_custom_call.1} parent=1 // pred_fallthru
      _
    // Predicated region
    $region34: #{tpu_custom_call.1} parent=1 // pred_check
      _
    $region35: #{tpu_custom_call.1} parent=1 // pred_check_branch
      %1027 = sbr.rel (0) target = $region37
    $region36: #{tpu_custom_call.1} parent=1 // pred_region
      %1028 = dma.done [#allocation4], 64
    $region37: #{tpu_custom_call.1} parent=1 // pred_fallthru
      _
    %1029 = vsyncpa [#allocation4], 1

</llo_original>
